<compile_context>
chip_gen: v5e
topology: v5e:2x2
jax: 0.10.0
libtpu: 0.0.40
codegen_flags: <defaults>
</compile_context>

<pallas_src>
import functools
import math

import jax
import jax.numpy as jnp
from jax import lax
from jax.experimental import pallas as pl
from jax.experimental.pallas import tpu as pltpu


def _mha_kernel(q_ref, k_ref, v_ref,
                wq_ref, bq_ref, wk_ref, bk_ref,
                wv_ref, bv_ref, wo_ref, bo_ref,
                o_ref, *, num_heads, key_dim):
    """One batch element per grid step. q_ref:(L,D) k_ref,v_ref:(M,D)."""
    L = q_ref.shape[0]
    M = k_ref.shape[0]
    H, Kd = num_heads, key_dim

    x_q = q_ref[...]
    x_k = k_ref[...]
    x_v = v_ref[...]

    # Fused projections: one wide MXU push each instead of H narrow (Kd=8) ones.
    # 1/sqrt(Kd) is already baked into wq_ref / bq_ref by the wrapper.
    q_all = jnp.dot(x_q, wq_ref[...], preferred_element_type=jnp.float32) + bq_ref[...]  # (L, H*Kd)
    k_all = jnp.dot(x_k, wk_ref[...], preferred_element_type=jnp.float32) + bk_ref[...]  # (M, H*Kd)
    vf = jnp.dot(x_v, wv_ref[...], preferred_element_type=jnp.float32) + bv_ref[...]     # (M, V)

    # causal mask: -inf strictly above the diagonal (== torch.triu(full(-inf), 1))
    row = lax.broadcasted_iota(jnp.int32, (L, M), 0)
    col = lax.broadcasted_iota(jnp.int32, (L, M), 1)
    mask = jnp.where(col > row, -jnp.inf, 0.0).astype(jnp.float32)

    vals = []
    for h in range(H):  # H is small and static -> unrolled; per-head live set is tiny now
        q_h = q_all[:, h * Kd:(h + 1) * Kd]   # (L, Kd) contiguous head slice
        k_h = k_all[:, h * Kd:(h + 1) * Kd]   # (M, Kd)
        # Contract on Kd of BOTH operands: MXU consumes the transposed
        # contraction natively, no k_h.T relayout.
        scores = lax.dot_general(q_h, k_h, (((1,), (1,)), ((), ())),
                                 preferred_element_type=jnp.float32) + mask   # (L, M)
        # numerically-stable softmax over the key axis; divide via EUP reciprocal
        smax = jnp.max(scores, axis=-1, keepdims=True)
        p = jnp.exp(scores - smax)
        denom = jnp.sum(p, axis=-1, keepdims=True)
        attn = p * pl.reciprocal(denom, approx=True)
        vals.append(jnp.dot(attn, vf, preferred_element_type=jnp.float32))   # (L, V)

    # One lane-dense (L, H*V) = (L, 128) operand -> single 128-deep output projection.
    vals_cat = jnp.concatenate(vals, axis=-1)
    out = jnp.dot(vals_cat, wo_ref[...], preferred_element_type=jnp.float32) + bo_ref[...]
    o_ref[...] = out.astype(o_ref.dtype)


def mha_forward(query, key, value, params, *, num_heads, key_dim, val_dim):
    """Pallas implementation of MHAttn.forward."""
    wq, bq, wk, bk, wv, bv, wo, bo = params
    B, L, D = query.shape
    M = key.shape[1]
    H, Kd, V = num_heads, key_dim, val_dim

    inv_scale = 1.0 / math.sqrt(float(Kd))

    # PyTorch reshape(B, L, Kd, H) means flat projection column j = kd*H + h
    # (head is the FAST axis). Re-pack to head-major j' = h*Kd + kd so the
    # kernel's per-head slices are contiguous; fold 1/sqrt(Kd) into Wq/bq.
    wq_hm = wq.reshape(D, Kd, H).transpose(0, 2, 1).reshape(D, H * Kd) * inv_scale
    bq_hm = bq.reshape(Kd, H).T.reshape(1, H * Kd) * inv_scale
    wk_hm = wk.reshape(D, Kd, H).transpose(0, 2, 1).reshape(D, H * Kd)
    bk_hm = bk.reshape(Kd, H).T.reshape(1, H * Kd)
    # vals.reshape(B, L, H*V) has flat index i = h*V + v, which is exactly the
    # head-major concatenation order used in the kernel -> W_o is used as-is.
    bv2 = bv.reshape(1, V)
    bo2 = bo.reshape(1, D)

    kernel = functools.partial(_mha_kernel, num_heads=H, key_dim=Kd)

    return pl.pallas_call(
        kernel,
        out_shape=jax.ShapeDtypeStruct((B, L, D), jnp.float32),
        grid_spec=pltpu.PrefetchScalarGridSpec(
            num_scalar_prefetch=0,
            grid=(B,),
            in_specs=[
                pl.BlockSpec((None, L, D), lambda b: (b, 0, 0)),     # query block
                pl.BlockSpec((None, M, D), lambda b: (b, 0, 0)),     # key block
                pl.BlockSpec((None, M, D), lambda b: (b, 0, 0)),     # value block
                pl.BlockSpec((D, H * Kd), lambda b: (0, 0)),         # W_q fused (head-major, pre-scaled)
                pl.BlockSpec((1, H * Kd), lambda b: (0, 0)),         # b_q fused
                pl.BlockSpec((D, H * Kd), lambda b: (0, 0)),         # W_k fused (head-major)
                pl.BlockSpec((1, H * Kd), lambda b: (0, 0)),         # b_k fused
                pl.BlockSpec((D, V), lambda b: (0, 0)),              # W_v
                pl.BlockSpec((1, V), lambda b: (0, 0)),              # b_v
                pl.BlockSpec((H * V, D), lambda b: (0, 0)),          # W_o (rows = h*V + v)
                pl.BlockSpec((1, D), lambda b: (0, 0)),              # b_o
            ],
            out_specs=pl.BlockSpec((None, L, D), lambda b: (b, 0, 0)),
        ),
        compiler_params=pltpu.CompilerParams(
            dimension_semantics=("parallel",),       # uses both TCs on v7x; ~free on 1-TC chips
            vmem_limit_bytes=32 * 1024 * 1024,
        ),
    )(query, key, value, wq_hm, bq_hm, wk_hm, bk_hm, wv, bv2, wo, bo2)


def mha_reference(query, key, value, params, *, num_heads, key_dim, val_dim):
    """Pure-JAX reference matching the PyTorch forward semantics."""
    wq, bq, wk, bk, wv, bv, wo, bo = params
    B, L, _ = query.shape
    M = key.shape[1]
    q = (query @ wq + bq).reshape(B, L, key_dim, num_heads)
    k = (key @ wk + bk).reshape(B, M, key_dim, num_heads)
    v = value @ wv + bv
    mask = jnp.where(jnp.triu(jnp.ones((L, M), bool), k=1), -jnp.inf, 0.0)
    scores = jnp.einsum('blkh,bmkh->bhlm', q, k) + mask
    attn = jax.nn.softmax(scores / jnp.sqrt(jnp.float32(key_dim)), axis=-1)
    vals = jnp.einsum('bhlm,bmv->blhv', attn, v).reshape(B, L, -1)
    return vals @ wo + bo


if __name__ == "__main__":
    # Small shapes consistent with the module: dims=32, heads=4 -> key_dim=8,
    # val_dim=32 (defaults key_dim=dims//heads, val_dim=dims).
    B, S, DIMS, HEADS = 2, 8, 32, 4
    KEY_DIM = DIMS // HEADS          # 8
    VAL_DIM = DIMS                   # 32

    key0 = jax.random.PRNGKey(0)
    ks = jax.random.split(key0, 16)

    def init(k, shape, scale=0.05):
        return (scale * jax.random.normal(k, shape)).astype(jnp.float32)

    # Parameters (input-major weights): deterministic synthetic init.
    wq = init(ks[0], (DIMS, KEY_DIM * HEADS))
    bq = init(ks[1], (KEY_DIM * HEADS,))
    wk = init(ks[2], (DIMS, KEY_DIM * HEADS))
    bk = init(ks[3], (KEY_DIM * HEADS,))
    wv = init(ks[4], (DIMS, VAL_DIM))
    bv = init(ks[5], (VAL_DIM,))
    wo = init(ks[6], (VAL_DIM * HEADS, DIMS))
    bo = init(ks[7], (DIMS,))
    params = (wq, bq, wk, bk, wv, bv, wo, bo)

    query = jax.random.normal(ks[8], (B, S, DIMS), jnp.float32)
    key_in = jax.random.normal(ks[9], (B, S, DIMS), jnp.float32)
    value = jax.random.normal(ks[10], (B, S, DIMS), jnp.float32)

    out = mha_forward(query, key_in, value, params,
                      num_heads=HEADS, key_dim=KEY_DIM, val_dim=VAL_DIM)
    out = jax.block_until_ready(out)

    ref = mha_reference(query, key_in, value, params,
                        num_heads=HEADS, key_dim=KEY_DIM, val_dim=VAL_DIM)
    assert out.shape == (B, S, DIMS)
    # Tolerance allows the approximate EUP reciprocal in the softmax divide.
    assert jnp.allclose(out, ref, rtol=1e-3, atol=1e-3), (
        f"max abs err {jnp.max(jnp.abs(out - ref))}")

    print("KERNEL_OK")
</pallas_src>

<mosaic_0001>
module attributes {stable_mosaic.version = 11 : i64} {
  func.func @_mha_kernel(%arg0: i32, %arg1: memref<1x8x32xf32, #tpu.memory_space<vmem>>, %arg2: memref<1x8x32xf32, #tpu.memory_space<vmem>>, %arg3: memref<1x8x32xf32, #tpu.memory_space<vmem>>, %arg4: memref<32x32xf32, #tpu.memory_space<vmem>>, %arg5: memref<1x32xf32, #tpu.memory_space<vmem>>, %arg6: memref<32x32xf32, #tpu.memory_space<vmem>>, %arg7: memref<1x32xf32, #tpu.memory_space<vmem>>, %arg8: memref<32x32xf32, #tpu.memory_space<vmem>>, %arg9: memref<1x32xf32, #tpu.memory_space<vmem>>, %arg10: memref<128x32xf32, #tpu.memory_space<vmem>>, %arg11: memref<1x32xf32, #tpu.memory_space<vmem>>, %arg12: memref<1x8x32xf32, #tpu.memory_space<vmem>>) attributes {dimension_semantics = [#tpu.dimension_semantics<parallel>], iteration_bounds = array<i64: 2>, scalar_prefetch = 0 : i64, scratch_operands = 0 : i64, tpu.core_type = #tpu.core_type<tc>, window_params = [{transform_indices = @transform_0, window_bounds = array<i64: 1, 8, 32>}, {transform_indices = @transform_1, window_bounds = array<i64: 1, 8, 32>}, {transform_indices = @transform_2, window_bounds = array<i64: 1, 8, 32>}, {pipeline_mode = #tpu.pipeline_mode<synchronous>, transform_indices = @transform_3, window_bounds = array<i64: 32, 32>}, {pipeline_mode = #tpu.pipeline_mode<synchronous>, transform_indices = @transform_4, window_bounds = array<i64: 1, 32>}, {pipeline_mode = #tpu.pipeline_mode<synchronous>, transform_indices = @transform_5, window_bounds = array<i64: 32, 32>}, {pipeline_mode = #tpu.pipeline_mode<synchronous>, transform_indices = @transform_6, window_bounds = array<i64: 1, 32>}, {pipeline_mode = #tpu.pipeline_mode<synchronous>, transform_indices = @transform_7, window_bounds = array<i64: 32, 32>}, {pipeline_mode = #tpu.pipeline_mode<synchronous>, transform_indices = @transform_8, window_bounds = array<i64: 1, 32>}, {pipeline_mode = #tpu.pipeline_mode<synchronous>, transform_indices = @transform_9, window_bounds = array<i64: 128, 32>}, {pipeline_mode = #tpu.pipeline_mode<synchronous>, transform_indices = @transform_10, window_bounds = array<i64: 1, 32>}, {transform_indices = @transform_11, window_bounds = array<i64: 1, 8, 32>}]} {
    %c0 = arith.constant 0 : index
    %c0_0 = arith.constant 0 : index
    %c0_1 = arith.constant 0 : index
    %0 = vector.load %arg1[%c0, %c0_0, %c0_1] : memref<1x8x32xf32, #tpu.memory_space<vmem>>, vector<1x8x32xf32>
    %1 = vector.shape_cast %0 : vector<1x8x32xf32> to vector<8x32xf32>
    %c0_2 = arith.constant 0 : index
    %c0_3 = arith.constant 0 : index
    %c0_4 = arith.constant 0 : index
    %2 = vector.load %arg2[%c0_2, %c0_3, %c0_4] : memref<1x8x32xf32, #tpu.memory_space<vmem>>, vector<1x8x32xf32>
    %3 = vector.shape_cast %2 : vector<1x8x32xf32> to vector<8x32xf32>
    %c0_5 = arith.constant 0 : index
    %c0_6 = arith.constant 0 : index
    %c0_7 = arith.constant 0 : index
    %4 = vector.load %arg3[%c0_5, %c0_6, %c0_7] : memref<1x8x32xf32, #tpu.memory_space<vmem>>, vector<1x8x32xf32>
    %5 = vector.shape_cast %4 : vector<1x8x32xf32> to vector<8x32xf32>
    %c0_8 = arith.constant 0 : index
    %c0_9 = arith.constant 0 : index
    %6 = vector.load %arg4[%c0_8, %c0_9] : memref<32x32xf32, #tpu.memory_space<vmem>>, vector<32x32xf32>
    %cst = arith.constant dense<0.000000e+00> : vector<8x32xf32>
    %7 = tpu.matmul %1, %6, %cst {dimension_numbers = #tpu.dot_dimension_numbers<[1], [0], [0], [1], [0, 0, 1, 1], [], []>} : vector<8x32xf32>, vector<32x32xf32>, vector<8x32xf32> -> vector<8x32xf32>
    %c0_10 = arith.constant 0 : index
    %c0_11 = arith.constant 0 : index
    %8 = vector.load %arg5[%c0_10, %c0_11] : memref<1x32xf32, #tpu.memory_space<vmem>>, vector<1x32xf32>
    %9 = vector.broadcast %8 : vector<1x32xf32> to vector<8x32xf32>
    %10 = arith.addf %7, %9 : vector<8x32xf32>
    %c0_12 = arith.constant 0 : index
    %c0_13 = arith.constant 0 : index
    %11 = vector.load %arg6[%c0_12, %c0_13] : memref<32x32xf32, #tpu.memory_space<vmem>>, vector<32x32xf32>
    %cst_14 = arith.constant dense<0.000000e+00> : vector<8x32xf32>
    %12 = tpu.matmul %3, %11, %cst_14 {dimension_numbers = #tpu.dot_dimension_numbers<[1], [0], [0], [1], [0, 0, 1, 1], [], []>} : vector<8x32xf32>, vector<32x32xf32>, vector<8x32xf32> -> vector<8x32xf32>
    %c0_15 = arith.constant 0 : index
    %c0_16 = arith.constant 0 : index
    %13 = vector.load %arg7[%c0_15, %c0_16] : memref<1x32xf32, #tpu.memory_space<vmem>>, vector<1x32xf32>
    %14 = vector.broadcast %13 : vector<1x32xf32> to vector<8x32xf32>
    %15 = arith.addf %12, %14 : vector<8x32xf32>
    %c0_17 = arith.constant 0 : index
    %c0_18 = arith.constant 0 : index
    %16 = vector.load %arg8[%c0_17, %c0_18] : memref<32x32xf32, #tpu.memory_space<vmem>>, vector<32x32xf32>
    %cst_19 = arith.constant dense<0.000000e+00> : vector<8x32xf32>
    %17 = tpu.matmul %5, %16, %cst_19 {dimension_numbers = #tpu.dot_dimension_numbers<[1], [0], [0], [1], [0, 0, 1, 1], [], []>} : vector<8x32xf32>, vector<32x32xf32>, vector<8x32xf32> -> vector<8x32xf32>
    %c0_20 = arith.constant 0 : index
    %c0_21 = arith.constant 0 : index
    %18 = vector.load %arg9[%c0_20, %c0_21] : memref<1x32xf32, #tpu.memory_space<vmem>>, vector<1x32xf32>
    %19 = vector.broadcast %18 : vector<1x32xf32> to vector<8x32xf32>
    %20 = arith.addf %17, %19 : vector<8x32xf32>
    %21 = tpu.iota {dimensions = array<i32: 0>} : vector<8x8xi32>
    %22 = tpu.iota {dimensions = array<i32: 1>} : vector<8x8xi32>
    %23 = arith.cmpi sgt, %22, %21 : vector<8x8xi32>
    %cst_22 = arith.constant 0xFF800000 : f32
    %cst_23 = arith.constant 0.000000e+00 : f32
    %24 = vector.broadcast %cst_22 : f32 to vector<8x8xf32>
    %25 = vector.broadcast %cst_23 : f32 to vector<8x8xf32>
    %26 = arith.select %23, %24, %25 : vector<8x8xi1>, vector<8x8xf32>
    %27 = vector.extract_strided_slice %10 {offsets = [0, 0], sizes = [8, 8], strides = [1, 1]} : vector<8x32xf32> to vector<8x8xf32>
    %28 = vector.extract_strided_slice %15 {offsets = [0, 0], sizes = [8, 8], strides = [1, 1]} : vector<8x32xf32> to vector<8x8xf32>
    %cst_24 = arith.constant dense<0.000000e+00> : vector<8x8xf32>
    %29 = tpu.matmul %27, %28, %cst_24 {dimension_numbers = #tpu.dot_dimension_numbers<[1], [1], [0], [0], [0, 0, 1, 0], [], []>} : vector<8x8xf32>, vector<8x8xf32>, vector<8x8xf32> -> vector<8x8xf32>
    %30 = arith.addf %29, %26 : vector<8x8xf32>
    %cst_25 = arith.constant dense<0xFF800000> : vector<8xf32>
    %31 = vector.multi_reduction <maximumf>, %30, %cst_25 [1] : vector<8x8xf32> to vector<8xf32>
    %32 = vector.shape_cast %31 : vector<8xf32> to vector<8x1xf32>
    %33 = vector.broadcast %32 : vector<8x1xf32> to vector<8x8xf32>
    %34 = arith.subf %30, %33 : vector<8x8xf32>
    %35 = math.exp %34 : vector<8x8xf32>
    %cst_26 = arith.constant dense<0.000000e+00> : vector<8xf32>
    %36 = vector.multi_reduction <add>, %35, %cst_26 [1] : vector<8x8xf32> to vector<8xf32>
    %37 = vector.shape_cast %36 : vector<8xf32> to vector<8x1xf32>
    %38 = tpu.reciprocal %37 {approx = true} : vector<8x1xf32> -> vector<8x1xf32>
    %39 = vector.broadcast %38 : vector<8x1xf32> to vector<8x8xf32>
    %40 = arith.mulf %35, %39 : vector<8x8xf32>
    %cst_27 = arith.constant dense<0.000000e+00> : vector<8x32xf32>
    %41 = tpu.matmul %40, %20, %cst_27 {dimension_numbers = #tpu.dot_dimension_numbers<[1], [0], [0], [1], [0, 0, 1, 1], [], []>} : vector<8x8xf32>, vector<8x32xf32>, vector<8x32xf32> -> vector<8x32xf32>
    %42 = vector.extract_strided_slice %10 {offsets = [0, 8], sizes = [8, 8], strides = [1, 1]} : vector<8x32xf32> to vector<8x8xf32>
    %43 = vector.extract_strided_slice %15 {offsets = [0, 8], sizes = [8, 8], strides = [1, 1]} : vector<8x32xf32> to vector<8x8xf32>
    %cst_28 = arith.constant dense<0.000000e+00> : vector<8x8xf32>
    %44 = tpu.matmul %42, %43, %cst_28 {dimension_numbers = #tpu.dot_dimension_numbers<[1], [1], [0], [0], [0, 0, 1, 0], [], []>} : vector<8x8xf32>, vector<8x8xf32>, vector<8x8xf32> -> vector<8x8xf32>
    %45 = arith.addf %44, %26 : vector<8x8xf32>
    %cst_29 = arith.constant dense<0xFF800000> : vector<8xf32>
    %46 = vector.multi_reduction <maximumf>, %45, %cst_29 [1] : vector<8x8xf32> to vector<8xf32>
    %47 = vector.shape_cast %46 : vector<8xf32> to vector<8x1xf32>
    %48 = vector.broadcast %47 : vector<8x1xf32> to vector<8x8xf32>
    %49 = arith.subf %45, %48 : vector<8x8xf32>
    %50 = math.exp %49 : vector<8x8xf32>
    %cst_30 = arith.constant dense<0.000000e+00> : vector<8xf32>
    %51 = vector.multi_reduction <add>, %50, %cst_30 [1] : vector<8x8xf32> to vector<8xf32>
    %52 = vector.shape_cast %51 : vector<8xf32> to vector<8x1xf32>
    %53 = tpu.reciprocal %52 {approx = true} : vector<8x1xf32> -> vector<8x1xf32>
    %54 = vector.broadcast %53 : vector<8x1xf32> to vector<8x8xf32>
    %55 = arith.mulf %50, %54 : vector<8x8xf32>
    %cst_31 = arith.constant dense<0.000000e+00> : vector<8x32xf32>
    %56 = tpu.matmul %55, %20, %cst_31 {dimension_numbers = #tpu.dot_dimension_numbers<[1], [0], [0], [1], [0, 0, 1, 1], [], []>} : vector<8x8xf32>, vector<8x32xf32>, vector<8x32xf32> -> vector<8x32xf32>
    %57 = vector.extract_strided_slice %10 {offsets = [0, 16], sizes = [8, 8], strides = [1, 1]} : vector<8x32xf32> to vector<8x8xf32>
    %58 = vector.extract_strided_slice %15 {offsets = [0, 16], sizes = [8, 8], strides = [1, 1]} : vector<8x32xf32> to vector<8x8xf32>
    %cst_32 = arith.constant dense<0.000000e+00> : vector<8x8xf32>
    %59 = tpu.matmul %57, %58, %cst_32 {dimension_numbers = #tpu.dot_dimension_numbers<[1], [1], [0], [0], [0, 0, 1, 0], [], []>} : vector<8x8xf32>, vector<8x8xf32>, vector<8x8xf32> -> vector<8x8xf32>
    %60 = arith.addf %59, %26 : vector<8x8xf32>
    %cst_33 = arith.constant dense<0xFF800000> : vector<8xf32>
    %61 = vector.multi_reduction <maximumf>, %60, %cst_33 [1] : vector<8x8xf32> to vector<8xf32>
    %62 = vector.shape_cast %61 : vector<8xf32> to vector<8x1xf32>
    %63 = vector.broadcast %62 : vector<8x1xf32> to vector<8x8xf32>
    %64 = arith.subf %60, %63 : vector<8x8xf32>
    %65 = math.exp %64 : vector<8x8xf32>
    %cst_34 = arith.constant dense<0.000000e+00> : vector<8xf32>
    %66 = vector.multi_reduction <add>, %65, %cst_34 [1] : vector<8x8xf32> to vector<8xf32>
    %67 = vector.shape_cast %66 : vector<8xf32> to vector<8x1xf32>
    %68 = tpu.reciprocal %67 {approx = true} : vector<8x1xf32> -> vector<8x1xf32>
    %69 = vector.broadcast %68 : vector<8x1xf32> to vector<8x8xf32>
    %70 = arith.mulf %65, %69 : vector<8x8xf32>
    %cst_35 = arith.constant dense<0.000000e+00> : vector<8x32xf32>
    %71 = tpu.matmul %70, %20, %cst_35 {dimension_numbers = #tpu.dot_dimension_numbers<[1], [0], [0], [1], [0, 0, 1, 1], [], []>} : vector<8x8xf32>, vector<8x32xf32>, vector<8x32xf32> -> vector<8x32xf32>
    %72 = vector.extract_strided_slice %10 {offsets = [0, 24], sizes = [8, 8], strides = [1, 1]} : vector<8x32xf32> to vector<8x8xf32>
    %73 = vector.extract_strided_slice %15 {offsets = [0, 24], sizes = [8, 8], strides = [1, 1]} : vector<8x32xf32> to vector<8x8xf32>
    %cst_36 = arith.constant dense<0.000000e+00> : vector<8x8xf32>
    %74 = tpu.matmul %72, %73, %cst_36 {dimension_numbers = #tpu.dot_dimension_numbers<[1], [1], [0], [0], [0, 0, 1, 0], [], []>} : vector<8x8xf32>, vector<8x8xf32>, vector<8x8xf32> -> vector<8x8xf32>
    %75 = arith.addf %74, %26 : vector<8x8xf32>
    %cst_37 = arith.constant dense<0xFF800000> : vector<8xf32>
    %76 = vector.multi_reduction <maximumf>, %75, %cst_37 [1] : vector<8x8xf32> to vector<8xf32>
    %77 = vector.shape_cast %76 : vector<8xf32> to vector<8x1xf32>
    %78 = vector.broadcast %77 : vector<8x1xf32> to vector<8x8xf32>
    %79 = arith.subf %75, %78 : vector<8x8xf32>
    %80 = math.exp %79 : vector<8x8xf32>
    %cst_38 = arith.constant dense<0.000000e+00> : vector<8xf32>
    %81 = vector.multi_reduction <add>, %80, %cst_38 [1] : vector<8x8xf32> to vector<8xf32>
    %82 = vector.shape_cast %81 : vector<8xf32> to vector<8x1xf32>
    %83 = tpu.reciprocal %82 {approx = true} : vector<8x1xf32> -> vector<8x1xf32>
    %84 = vector.broadcast %83 : vector<8x1xf32> to vector<8x8xf32>
    %85 = arith.mulf %80, %84 : vector<8x8xf32>
    %cst_39 = arith.constant dense<0.000000e+00> : vector<8x32xf32>
    %86 = tpu.matmul %85, %20, %cst_39 {dimension_numbers = #tpu.dot_dimension_numbers<[1], [0], [0], [1], [0, 0, 1, 1], [], []>} : vector<8x8xf32>, vector<8x32xf32>, vector<8x32xf32> -> vector<8x32xf32>
    %87 = tpu.concatenate %41, %56, %71, %86 in 1 : vector<8x32xf32>, vector<8x32xf32>, vector<8x32xf32>, vector<8x32xf32> -> vector<8x128xf32>
    %c0_40 = arith.constant 0 : index
    %c0_41 = arith.constant 0 : index
    %88 = vector.load %arg10[%c0_40, %c0_41] : memref<128x32xf32, #tpu.memory_space<vmem>>, vector<128x32xf32>
    %cst_42 = arith.constant dense<0.000000e+00> : vector<8x32xf32>
    %89 = tpu.matmul %87, %88, %cst_42 {dimension_numbers = #tpu.dot_dimension_numbers<[1], [0], [0], [1], [0, 0, 1, 1], [], []>} : vector<8x128xf32>, vector<128x32xf32>, vector<8x32xf32> -> vector<8x32xf32>
    %c0_43 = arith.constant 0 : index
    %c0_44 = arith.constant 0 : index
    %90 = vector.load %arg11[%c0_43, %c0_44] : memref<1x32xf32, #tpu.memory_space<vmem>>, vector<1x32xf32>
    %91 = vector.broadcast %90 : vector<1x32xf32> to vector<8x32xf32>
    %92 = arith.addf %89, %91 : vector<8x32xf32>
    %c0_45 = arith.constant 0 : index
    %c0_46 = arith.constant 0 : index
    %c0_47 = arith.constant 0 : index
    %93 = vector.load %arg12[%c0_45, %c0_46, %c0_47] : memref<1x8x32xf32, #tpu.memory_space<vmem>>, vector<1x8x32xf32>
    %94 = vector.shape_cast %93 : vector<1x8x32xf32> to vector<8x32xf32>
    %95 = vector.shape_cast %92 : vector<8x32xf32> to vector<1x8x32xf32>
    tpu.vector_store %arg12[%c0_45, %c0_46, %c0_47], %95 {strides = array<i32>} : memref<1x8x32xf32, #tpu.memory_space<vmem>>, vector<1x8x32xf32>,
    return
  }
  func.func @transform_0(%arg0: i32) -> (i32, i32, i32) {
    %c0_i32 = arith.constant 0 : i32
    %c0_i32_0 = arith.constant 0 : i32
    %c0_i32_1 = arith.constant 0 : i32
    return %arg0, %c0_i32, %c0_i32_0 : i32, i32, i32
  }
  func.func @transform_1(%arg0: i32) -> (i32, i32, i32) {
    %c0_i32 = arith.constant 0 : i32
    %c0_i32_0 = arith.constant 0 : i32
    %c0_i32_1 = arith.constant 0 : i32
    return %arg0, %c0_i32, %c0_i32_0 : i32, i32, i32
  }
  func.func @transform_2(%arg0: i32) -> (i32, i32, i32) {
    %c0_i32 = arith.constant 0 : i32
    %c0_i32_0 = arith.constant 0 : i32
    %c0_i32_1 = arith.constant 0 : i32
    return %arg0, %c0_i32, %c0_i32_0 : i32, i32, i32
  }
  func.func @transform_3(%arg0: i32) -> (i32, i32) {
    %c0_i32 = arith.constant 0 : i32
    %c0_i32_0 = arith.constant 0 : i32
    %c0_i32_1 = arith.constant 0 : i32
    return %c0_i32, %c0_i32_0 : i32, i32
  }
  func.func @transform_4(%arg0: i32) -> (i32, i32) {
    %c0_i32 = arith.constant 0 : i32
    %c0_i32_0 = arith.constant 0 : i32
    %c0_i32_1 = arith.constant 0 : i32
    return %c0_i32, %c0_i32_0 : i32, i32
  }
  func.func @transform_5(%arg0: i32) -> (i32, i32) {
    %c0_i32 = arith.constant 0 : i32
    %c0_i32_0 = arith.constant 0 : i32
    %c0_i32_1 = arith.constant 0 : i32
    return %c0_i32, %c0_i32_0 : i32, i32
  }
  func.func @transform_6(%arg0: i32) -> (i32, i32) {
    %c0_i32 = arith.constant 0 : i32
    %c0_i32_0 = arith.constant 0 : i32
    %c0_i32_1 = arith.constant 0 : i32
    return %c0_i32, %c0_i32_0 : i32, i32
  }
  func.func @transform_7(%arg0: i32) -> (i32, i32) {
    %c0_i32 = arith.constant 0 : i32
    %c0_i32_0 = arith.constant 0 : i32
    %c0_i32_1 = arith.constant 0 : i32
    return %c0_i32, %c0_i32_0 : i32, i32
  }
  func.func @transform_8(%arg0: i32) -> (i32, i32) {
    %c0_i32 = arith.constant 0 : i32
    %c0_i32_0 = arith.constant 0 : i32
    %c0_i32_1 = arith.constant 0 : i32
    return %c0_i32, %c0_i32_0 : i32, i32
  }
  func.func @transform_9(%arg0: i32) -> (i32, i32) {
    %c0_i32 = arith.constant 0 : i32
    %c0_i32_0 = arith.constant 0 : i32
    %c0_i32_1 = arith.constant 0 : i32
    return %c0_i32, %c0_i32_0 : i32, i32
  }
  func.func @transform_10(%arg0: i32) -> (i32, i32) {
    %c0_i32 = arith.constant 0 : i32
    %c0_i32_0 = arith.constant 0 : i32
    %c0_i32_1 = arith.constant 0 : i32
    return %c0_i32, %c0_i32_0 : i32, i32
  }
  func.func @transform_11(%arg0: i32) -> (i32, i32, i32) {
    %c0_i32 = arith.constant 0 : i32
    %c0_i32_0 = arith.constant 0 : i32
    %c0_i32_1 = arith.constant 0 : i32
    return %arg0, %c0_i32, %c0_i32_0 : i32, i32, i32
  }
}

</mosaic_0001>

<llo_original>
// kernel: tpu_custom_call.1
$region0: #{tpu_custom_call.1}
  #allocation0 [shape = 'u32[]', space=smem, size = 0x4, offset = 0x4, fixed_abs, tag = 'smem constant byte address 0x4 - core index']
  #allocation1 [shape = 'u32[72,128]{1,0:T(1,128)}', space=vmem, size = 0x9000, scoped, tag = 'internal scratch']
  %s0 = inlined_call_operand.vmem [shape: f32[2,8,32], index: 0, kind: input, shape index: {}]
  %s1 = inlined_call_operand.vmem [shape: f32[2,8,32], index: 1, kind: input, shape index: {}]
  %s2 = inlined_call_operand.vmem [shape: f32[2,8,32], index: 2, kind: input, shape index: {}]
  %s3 = inlined_call_operand.vmem [shape: f32[32,32], index: 3, kind: input, shape index: {}]
  %s4 = inlined_call_operand.vmem [shape: f32[1,32], index: 4, kind: input, shape index: {}]
  %s5 = inlined_call_operand.vmem [shape: f32[32,32], index: 5, kind: input, shape index: {}]
  %s6 = inlined_call_operand.vmem [shape: f32[1,32], index: 6, kind: input, shape index: {}]
  %s7 = inlined_call_operand.vmem [shape: f32[32,32], index: 7, kind: input, shape index: {}]
  %s8 = inlined_call_operand.vmem [shape: f32[1,32], index: 8, kind: input, shape index: {}]
  %s9 = inlined_call_operand.vmem [shape: f32[128,32], index: 9, kind: input, shape index: {}]
  %s10 = inlined_call_operand.vmem [shape: f32[1,32], index: 10, kind: input, shape index: {}]
  %s11 = inlined_call_operand.hbm [shape: f32[2,8,32], index: 11, kind: output, shape index: {}]
  %s12 = sld [smem:[#allocation0]]
  $region77: #{tpu_custom_call.1} parent=0
    _
  %s14 = ssub.s32 1, %s12
  %s15 = scalar_select 0, %s14, %s12
  $region1: #{tpu_custom_call.1} parent=0
    #allocation2 [shape = 'u8[8192]{0}', space=vmem, size = 0x2000, scoped, tag = 'output window, operand 0']
    #allocation3 [shape = 's32[2]{0}', space=sflag, size = 0x8, scoped, tag = 'scoped memory for tpu_custom_call.1']
    %16 = vsyncpa [#allocation3], 0
    %s17 = scalar_lea.sflag [#allocation3], 1
    %18 = vsyncpa %s17, 0
    loop: start=0, step=1, limit=4
    $region2: #{tpu_custom_call.1} parent=1 // loop_pre_header
      _
    $region3: #{tpu_custom_call.1} parent=1 // loop_header
      %s20 = sphi 0, %s24
      %p21 = scmp.ge.s32.totalorder %s20, 4
      %s30 = sphi 0, %s32
      %s33 = sphi 0, %s30
      %s34 = sphi 0, %s33
      %s50 = sphi 0, %s34
      %s56 = sphi 0, %s58
      %s59 = sphi 0, %s56
      %s60 = sphi 0, %s59
      %s76 = sphi 0, %s60
      %s82 = sphi 0, %s84
      %s85 = sphi 0, %s82
      %s86 = sphi 0, %s85
      %s102 = sphi 0, %s86
      %s106 = sphi 0, %s106
      %s108 = sphi 0, %s106
      %s109 = sphi 0, %s108
      %s123 = sphi 0, %s109
      %s127 = sphi 0, %s127
      %s129 = sphi 0, %s127
      %s130 = sphi 0, %s129
      %s144 = sphi 0, %s130
      %s148 = sphi 0, %s148
      %s150 = sphi 0, %s148
      %s151 = sphi 0, %s150
      %s165 = sphi 0, %s151
      %s169 = sphi 0, %s169
      %s171 = sphi 0, %s169
      %s172 = sphi 0, %s171
      %s186 = sphi 0, %s172
      %s190 = sphi 0, %s190
      %s192 = sphi 0, %s190
      %s193 = sphi 0, %s192
      %s207 = sphi 0, %s193
      %s211 = sphi 0, %s211
      %s213 = sphi 0, %s211
      %s214 = sphi 0, %s213
      %s228 = sphi 0, %s214
      %s232 = sphi 0, %s232
      %s234 = sphi 0, %s232
      %s235 = sphi 0, %s234
      %s249 = sphi 0, %s235
      %s253 = sphi 0, %s253
      %s255 = sphi 0, %s253
      %s256 = sphi 0, %s255
      %s270 = sphi 0, %s256
      %s276 = sphi 0, %s278
      %s279 = sphi 0, %s276
      %s280 = sphi 0, %s279
      %s296 = sphi 0, %s280
    $region4: #{tpu_custom_call.1} parent=1 // loop_header_branch
      %23 = sbr.rel (%p21) target = $region8
    $region5: #{tpu_custom_call.1} parent=1 // loop_body
      %s25 = ssub.s32 %s20, 1
      %s26 = ssub.s32 %s20, 2
      %s27 = sadd.s32 %s20, 1
      %s28 = ssub.s32 %s20, %s27
      %p29 = scmp.eq.s32.totalorder %s28, 0
      %s31 = sadd.s32 %s30, 1
      %s32 = scalar_select %p29, %s30, %s31
      %p35 = pneg %p29
      %p36 = scmp.eq.s32.totalorder %s20, 1
      %p37 = por %p35, %p36
      %p38 = scmp.ne.s32.totalorder %s30, %s33
      %p39 = scmp.eq.s32.totalorder %s20, 0
      %p40 = por %p38, %p39
      %p41 = scmp.ne.s32.totalorder %s30, %s33
      %p42 = scmp.eq.s32.totalorder %s25, 1
      %p43 = por %p41, %p42
      %p44 = scmp.ne.s32.totalorder %s33, %s34
      %p45 = scmp.eq.s32.totalorder %s25, 0
      %p46 = por %p44, %p45
      %p47 = scmp.ne.s32.totalorder %s33, %s34
      %p48 = scmp.eq.s32.totalorder %s26, 1
      %p49 = por %p47, %p48
      %p51 = scmp.ne.s32.totalorder %s34, %s50
      %p52 = scmp.eq.s32.totalorder %s26, 0
      %p53 = por %p51, %p52
      %s54 = ssub.s32 %s20, %s27
      %p55 = scmp.eq.s32.totalorder %s54, 0
      %s57 = sadd.s32 %s56, 1
      %s58 = scalar_select %p55, %s56, %s57
      %p61 = pneg %p55
      %p62 = scmp.eq.s32.totalorder %s20, 1
      %p63 = por %p61, %p62
      %p64 = scmp.ne.s32.totalorder %s56, %s59
      %p65 = scmp.eq.s32.totalorder %s20, 0
      %p66 = por %p64, %p65
      %p67 = scmp.ne.s32.totalorder %s56, %s59
      %p68 = scmp.eq.s32.totalorder %s25, 1
      %p69 = por %p67, %p68
      %p70 = scmp.ne.s32.totalorder %s59, %s60
      %p71 = scmp.eq.s32.totalorder %s25, 0
      %p72 = por %p70, %p71
      %p73 = scmp.ne.s32.totalorder %s59, %s60
      %p74 = scmp.eq.s32.totalorder %s26, 1
      %p75 = por %p73, %p74
      %p77 = scmp.ne.s32.totalorder %s60, %s76
      %p78 = scmp.eq.s32.totalorder %s26, 0
      %p79 = por %p77, %p78
      %s80 = ssub.s32 %s20, %s27
      %p81 = scmp.eq.s32.totalorder %s80, 0
      %s83 = sadd.s32 %s82, 1
      %s84 = scalar_select %p81, %s82, %s83
      %p87 = pneg %p81
      %p88 = scmp.eq.s32.totalorder %s20, 1
      %p89 = por %p87, %p88
      %p90 = scmp.ne.s32.totalorder %s82, %s85
      %p91 = scmp.eq.s32.totalorder %s20, 0
      %p92 = por %p90, %p91
      %p93 = scmp.ne.s32.totalorder %s82, %s85
      %p94 = scmp.eq.s32.totalorder %s25, 1
      %p95 = por %p93, %p94
      %p96 = scmp.ne.s32.totalorder %s85, %s86
      %p97 = scmp.eq.s32.totalorder %s25, 0
      %p98 = por %p96, %p97
      %p99 = scmp.ne.s32.totalorder %s85, %s86
      %p100 = scmp.eq.s32.totalorder %s26, 1
      %p101 = por %p99, %p100
      %p103 = scmp.ne.s32.totalorder %s86, %s102
      %p104 = scmp.eq.s32.totalorder %s26, 0
      %p105 = por %p103, %p104
      %s107 = sadd.s32 %s106, 1
      %p110 = scmp.eq.s32.totalorder %s20, 1
      %p111 = scmp.ne.s32.totalorder %s106, %s108
      %p112 = scmp.eq.s32.totalorder %s20, 0
      %p113 = por %p111, %p112
      %p114 = scmp.ne.s32.totalorder %s106, %s108
      %p115 = scmp.eq.s32.totalorder %s25, 1
      %p116 = por %p114, %p115
      %p117 = scmp.ne.s32.totalorder %s108, %s109
      %p118 = scmp.eq.s32.totalorder %s25, 0
      %p119 = por %p117, %p118
      %p120 = scmp.ne.s32.totalorder %s108, %s109
      %p121 = scmp.eq.s32.totalorder %s26, 1
      %p122 = por %p120, %p121
      %p124 = scmp.ne.s32.totalorder %s109, %s123
      %p125 = scmp.eq.s32.totalorder %s26, 0
      %p126 = por %p124, %p125
      %s128 = sadd.s32 %s127, 1
      %p131 = scmp.eq.s32.totalorder %s20, 1
      %p132 = scmp.ne.s32.totalorder %s127, %s129
      %p133 = scmp.eq.s32.totalorder %s20, 0
      %p134 = por %p132, %p133
      %p135 = scmp.ne.s32.totalorder %s127, %s129
      %p136 = scmp.eq.s32.totalorder %s25, 1
      %p137 = por %p135, %p136
      %p138 = scmp.ne.s32.totalorder %s129, %s130
      %p139 = scmp.eq.s32.totalorder %s25, 0
      %p140 = por %p138, %p139
      %p141 = scmp.ne.s32.totalorder %s129, %s130
      %p142 = scmp.eq.s32.totalorder %s26, 1
      %p143 = por %p141, %p142
      %p145 = scmp.ne.s32.totalorder %s130, %s144
      %p146 = scmp.eq.s32.totalorder %s26, 0
      %p147 = por %p145, %p146
      %s149 = sadd.s32 %s148, 1
      %p152 = scmp.eq.s32.totalorder %s20, 1
      %p153 = scmp.ne.s32.totalorder %s148, %s150
      %p154 = scmp.eq.s32.totalorder %s20, 0
      %p155 = por %p153, %p154
      %p156 = scmp.ne.s32.totalorder %s148, %s150
      %p157 = scmp.eq.s32.totalorder %s25, 1
      %p158 = por %p156, %p157
      %p159 = scmp.ne.s32.totalorder %s150, %s151
      %p160 = scmp.eq.s32.totalorder %s25, 0
      %p161 = por %p159, %p160
      %p162 = scmp.ne.s32.totalorder %s150, %s151
      %p163 = scmp.eq.s32.totalorder %s26, 1
      %p164 = por %p162, %p163
      %p166 = scmp.ne.s32.totalorder %s151, %s165
      %p167 = scmp.eq.s32.totalorder %s26, 0
      %p168 = por %p166, %p167
      %s170 = sadd.s32 %s169, 1
      %p173 = scmp.eq.s32.totalorder %s20, 1
      %p174 = scmp.ne.s32.totalorder %s169, %s171
      %p175 = scmp.eq.s32.totalorder %s20, 0
      %p176 = por %p174, %p175
      %p177 = scmp.ne.s32.totalorder %s169, %s171
      %p178 = scmp.eq.s32.totalorder %s25, 1
      %p179 = por %p177, %p178
      %p180 = scmp.ne.s32.totalorder %s171, %s172
      %p181 = scmp.eq.s32.totalorder %s25, 0
      %p182 = por %p180, %p181
      %p183 = scmp.ne.s32.totalorder %s171, %s172
      %p184 = scmp.eq.s32.totalorder %s26, 1
      %p185 = por %p183, %p184
      %p187 = scmp.ne.s32.totalorder %s172, %s186
      %p188 = scmp.eq.s32.totalorder %s26, 0
      %p189 = por %p187, %p188
      %s191 = sadd.s32 %s190, 1
      %p194 = scmp.eq.s32.totalorder %s20, 1
      %p195 = scmp.ne.s32.totalorder %s190, %s192
      %p196 = scmp.eq.s32.totalorder %s20, 0
      %p197 = por %p195, %p196
      %p198 = scmp.ne.s32.totalorder %s190, %s192
      %p199 = scmp.eq.s32.totalorder %s25, 1
      %p200 = por %p198, %p199
      %p201 = scmp.ne.s32.totalorder %s192, %s193
      %p202 = scmp.eq.s32.totalorder %s25, 0
      %p203 = por %p201, %p202
      %p204 = scmp.ne.s32.totalorder %s192, %s193
      %p205 = scmp.eq.s32.totalorder %s26, 1
      %p206 = por %p204, %p205
      %p208 = scmp.ne.s32.totalorder %s193, %s207
      %p209 = scmp.eq.s32.totalorder %s26, 0
      %p210 = por %p208, %p209
      %s212 = sadd.s32 %s211, 1
      %p215 = scmp.eq.s32.totalorder %s20, 1
      %p216 = scmp.ne.s32.totalorder %s211, %s213
      %p217 = scmp.eq.s32.totalorder %s20, 0
      %p218 = por %p216, %p217
      %p219 = scmp.ne.s32.totalorder %s211, %s213
      %p220 = scmp.eq.s32.totalorder %s25, 1
      %p221 = por %p219, %p220
      %p222 = scmp.ne.s32.totalorder %s213, %s214
      %p223 = scmp.eq.s32.totalorder %s25, 0
      %p224 = por %p222, %p223
      %p225 = scmp.ne.s32.totalorder %s213, %s214
      %p226 = scmp.eq.s32.totalorder %s26, 1
      %p227 = por %p225, %p226
      %p229 = scmp.ne.s32.totalorder %s214, %s228
      %p230 = scmp.eq.s32.totalorder %s26, 0
      %p231 = por %p229, %p230
      %s233 = sadd.s32 %s232, 1
      %p236 = scmp.eq.s32.totalorder %s20, 1
      %p237 = scmp.ne.s32.totalorder %s232, %s234
      %p238 = scmp.eq.s32.totalorder %s20, 0
      %p239 = por %p237, %p238
      %p240 = scmp.ne.s32.totalorder %s232, %s234
      %p241 = scmp.eq.s32.totalorder %s25, 1
      %p242 = por %p240, %p241
      %p243 = scmp.ne.s32.totalorder %s234, %s235
      %p244 = scmp.eq.s32.totalorder %s25, 0
      %p245 = por %p243, %p244
      %p246 = scmp.ne.s32.totalorder %s234, %s235
      %p247 = scmp.eq.s32.totalorder %s26, 1
      %p248 = por %p246, %p247
      %p250 = scmp.ne.s32.totalorder %s235, %s249
      %p251 = scmp.eq.s32.totalorder %s26, 0
      %p252 = por %p250, %p251
      %s254 = sadd.s32 %s253, 1
      %p257 = scmp.eq.s32.totalorder %s20, 1
      %p258 = scmp.ne.s32.totalorder %s253, %s255
      %p259 = scmp.eq.s32.totalorder %s20, 0
      %p260 = por %p258, %p259
      %p261 = scmp.ne.s32.totalorder %s253, %s255
      %p262 = scmp.eq.s32.totalorder %s25, 1
      %p263 = por %p261, %p262
      %p264 = scmp.ne.s32.totalorder %s255, %s256
      %p265 = scmp.eq.s32.totalorder %s25, 0
      %p266 = por %p264, %p265
      %p267 = scmp.ne.s32.totalorder %s255, %s256
      %p268 = scmp.eq.s32.totalorder %s26, 1
      %p269 = por %p267, %p268
      %p271 = scmp.ne.s32.totalorder %s256, %s270
      %p272 = scmp.eq.s32.totalorder %s26, 0
      %p273 = por %p271, %p272
      %s274 = ssub.s32 %s20, %s27
      %p275 = scmp.eq.s32.totalorder %s274, 0
      %s277 = sadd.s32 %s276, 1
      %s278 = scalar_select %p275, %s276, %s277
      %p281 = pneg %p275
      %p282 = scmp.eq.s32.totalorder %s20, 1
      %p283 = por %p281, %p282
      %p284 = scmp.ne.s32.totalorder %s276, %s279
      %p285 = scmp.eq.s32.totalorder %s20, 0
      %p286 = por %p284, %p285
      %p287 = scmp.ne.s32.totalorder %s276, %s279
      %p288 = scmp.eq.s32.totalorder %s25, 1
      %p289 = por %p287, %p288
      %p290 = scmp.ne.s32.totalorder %s279, %s280
      %p291 = scmp.eq.s32.totalorder %s25, 0
      %p292 = por %p290, %p291
      %p293 = scmp.ne.s32.totalorder %s279, %s280
      %p294 = scmp.eq.s32.totalorder %s26, 1
      %p295 = por %p293, %p294
      %p297 = scmp.ne.s32.totalorder %s280, %s296
      %p298 = scmp.eq.s32.totalorder %s26, 0
      %p299 = por %p297, %p298
      %p300 = scmp.le.s32.totalorder 1, %s20
      %p301 = scmp.lt.s32.totalorder %s20, 3
      %p302 = pnand %p300, %p301
      %p303 = pneg %p302
      // Predicated region
      $region9: #{tpu_custom_call.1} parent=5 // pred_check
        _
      $region10: #{tpu_custom_call.1} parent=5 // pred_check_branch
        %305 = sbr.rel (%p302) target = $region12
      $region11: #{tpu_custom_call.1} parent=5 // pred_region
        %s306 = ssub.s32 %s20, 1
        // Predicated region
        $region13: #{tpu_custom_call.1} parent=11 // pred_check
          %p307 = pneg %p119
        $region14: #{tpu_custom_call.1} parent=11 // pred_check_branch
          %309 = sbr.rel (%p307) target = $region16
        $region15: #{tpu_custom_call.1} parent=11 // pred_region
          _
        $region16: #{tpu_custom_call.1} parent=11 // pred_fallthru
          _
        // Predicated region
        $region17: #{tpu_custom_call.1} parent=11 // pred_check
          %p310 = pneg %p140
        $region18: #{tpu_custom_call.1} parent=11 // pred_check_branch
          %312 = sbr.rel (%p310) target = $region20
        $region19: #{tpu_custom_call.1} parent=11 // pred_region
          _
        $region20: #{tpu_custom_call.1} parent=11 // pred_fallthru
          _
        // Predicated region
        $region21: #{tpu_custom_call.1} parent=11 // pred_check
          %p313 = pneg %p161
        $region22: #{tpu_custom_call.1} parent=11 // pred_check_branch
          %315 = sbr.rel (%p313) target = $region24
        $region23: #{tpu_custom_call.1} parent=11 // pred_region
          _
        $region24: #{tpu_custom_call.1} parent=11 // pred_fallthru
          _
        // Predicated region
        $region25: #{tpu_custom_call.1} parent=11 // pred_check
          %p316 = pneg %p182
        $region26: #{tpu_custom_call.1} parent=11 // pred_check_branch
          %318 = sbr.rel (%p316) target = $region28
        $region27: #{tpu_custom_call.1} parent=11 // pred_region
          _
        $region28: #{tpu_custom_call.1} parent=11 // pred_fallthru
          _
        // Predicated region
        $region29: #{tpu_custom_call.1} parent=11 // pred_check
          %p319 = pneg %p203
        $region30: #{tpu_custom_call.1} parent=11 // pred_check_branch
          %321 = sbr.rel (%p319) target = $region32
        $region31: #{tpu_custom_call.1} parent=11 // pred_region
          _
        $region32: #{tpu_custom_call.1} parent=11 // pred_fallthru
          _
        // Predicated region
        $region33: #{tpu_custom_call.1} parent=11 // pred_check
          %p322 = pneg %p224
        $region34: #{tpu_custom_call.1} parent=11 // pred_check_branch
          %324 = sbr.rel (%p322) target = $region36
        $region35: #{tpu_custom_call.1} parent=11 // pred_region
          _
        $region36: #{tpu_custom_call.1} parent=11 // pred_fallthru
          _
        // Predicated region
        $region37: #{tpu_custom_call.1} parent=11 // pred_check
          %p325 = pneg %p245
        $region38: #{tpu_custom_call.1} parent=11 // pred_check_branch
          %327 = sbr.rel (%p325) target = $region40
        $region39: #{tpu_custom_call.1} parent=11 // pred_region
          _
        $region40: #{tpu_custom_call.1} parent=11 // pred_fallthru
          _
        // Predicated region
        $region41: #{tpu_custom_call.1} parent=11 // pred_check
          %p328 = pneg %p266
        $region42: #{tpu_custom_call.1} parent=11 // pred_check_branch
          %330 = sbr.rel (%p328) target = $region44
        $region43: #{tpu_custom_call.1} parent=11 // pred_region
          _
        $region44: #{tpu_custom_call.1} parent=11 // pred_fallthru
          _
      $region12: #{tpu_custom_call.1} parent=5 // pred_fallthru
        _
      %p331 = scmp.lt.s32.totalorder %s20, 2
      // Predicated region
      $region45: #{tpu_custom_call.1} parent=5 // pred_check
        %p332 = pneg %p331
      $region46: #{tpu_custom_call.1} parent=5 // pred_check_branch
        %334 = sbr.rel (%p332) target = $region48
      $region47: #{tpu_custom_call.1} parent=5 // pred_region
        // Predicated region
        $region49: #{tpu_custom_call.1} parent=47 // pred_check
          %p335 = pneg %p40
        $region50: #{tpu_custom_call.1} parent=47 // pred_check_branch
          %337 = sbr.rel (%p335) target = $region52
        $region51: #{tpu_custom_call.1} parent=47 // pred_region
          %p338 = scmp.lt.s32.totalorder %s20, 1
          %s339 = scalar_select %p338, %s20, 1
          %s340 = smul.addr %s339, 8
          %s341 = scalar_lea.vmem %s0, %s340
        $region52: #{tpu_custom_call.1} parent=47 // pred_fallthru
          _
        // Predicated region
        $region53: #{tpu_custom_call.1} parent=47 // pred_check
          %p342 = pneg %p66
        $region54: #{tpu_custom_call.1} parent=47 // pred_check_branch
          %344 = sbr.rel (%p342) target = $region56
        $region55: #{tpu_custom_call.1} parent=47 // pred_region
          %p345 = scmp.lt.s32.totalorder %s20, 1
          %s346 = scalar_select %p345, %s20, 1
          %s347 = smul.addr %s346, 8
          %s348 = scalar_lea.vmem %s1, %s347
        $region56: #{tpu_custom_call.1} parent=47 // pred_fallthru
          _
        // Predicated region
        $region57: #{tpu_custom_call.1} parent=47 // pred_check
          %p349 = pneg %p92
        $region58: #{tpu_custom_call.1} parent=47 // pred_check_branch
          %351 = sbr.rel (%p349) target = $region60
        $region59: #{tpu_custom_call.1} parent=47 // pred_region
          %p352 = scmp.lt.s32.totalorder %s20, 1
          %s353 = scalar_select %p352, %s20, 1
          %s354 = smul.addr %s353, 8
          %s355 = scalar_lea.vmem %s2, %s354
        $region60: #{tpu_custom_call.1} parent=47 // pred_fallthru
          _
      $region48: #{tpu_custom_call.1} parent=5 // pred_fallthru
        _
      %p356 = scmp.le.s32.totalorder 1, %s20
      %p357 = scmp.lt.s32.totalorder %s20, 3
      %p358 = pnand %p356, %p357
      %p359 = pneg %p358
      // Predicated region
      $region61: #{tpu_custom_call.1} parent=5 // pred_check
        _
      $region62: #{tpu_custom_call.1} parent=5 // pred_check_branch
        %361 = sbr.rel (%p358) target = $region64
      $region63: #{tpu_custom_call.1} parent=5 // pred_region
        %s362 = ssub.s32 %s20, 1
        %p363 = scmp.lt.s32.totalorder %s25, 1
        %s364 = scalar_select %p363, %s25, 1
        %s365 = smul.addr %s364, 8
        %s366 = scalar_lea.vmem %s0, %s365
        %p367 = pneg %p46
        %p368 = pneg %p43
        %p369 = scmp.lt.s32.totalorder %s25, 1
        %s370 = scalar_select %p369, %s25, 1
        %s371 = smul.addr %s370, 8
        %s372 = scalar_lea.vmem %s1, %s371
        %p373 = pneg %p72
        %p374 = pneg %p69
        %p375 = scmp.lt.s32.totalorder %s25, 1
        %s376 = scalar_select %p375, %s25, 1
        %s377 = smul.addr %s376, 8
        %s378 = scalar_lea.vmem %s2, %s377
        %p379 = pneg %p98
        %p380 = pneg %p95
        %p381 = pneg %p119
        %p382 = pneg %p116
        %p383 = pneg %p140
        %p384 = pneg %p137
        %p385 = pneg %p161
        %p386 = pneg %p158
        %p387 = pneg %p182
        %p388 = pneg %p179
        %p389 = pneg %p203
        %p390 = pneg %p200
        %p391 = pneg %p224
        %p392 = pneg %p221
        %p393 = pneg %p245
        %p394 = pneg %p242
        %p395 = pneg %p266
        %p396 = pneg %p263
        %p397 = pneg %p292
        %p398 = pneg %p289
        %s399 = sand.u32 %s279, 1
        %s400 = scalar_lea.sflag [#allocation3], %s399
        %s401 = sand.u32 %s279, 1
        %s402 = smul.addr %s401, 8
        %s403 = scalar_lea.vmem [#allocation2], %s402
        %p404 = scmp.lt.s32.totalorder %s25, 1
        %s405 = scalar_select %p404, %s25, 1
        %s406 = smul.addr %s405, 8
        %s407 = scalar_lea.vmem %s0, %s406
        %p408 = scmp.lt.s32.totalorder %s25, 1
        %s409 = scalar_select %p408, %s25, 1
        %s410 = smul.addr %s409, 8
        %s411 = scalar_lea.vmem %s1, %s410
        %p412 = scmp.lt.s32.totalorder %s25, 1
        %s413 = scalar_select %p412, %s25, 1
        %s414 = smul.addr %s413, 8
        %s415 = scalar_lea.vmem %s2, %s414
        %v416 = vld [vmem:[%s407] sm:$0xff]
        %v417 = vld [vmem:[%s411] sm:$0xff]
        %v418 = vld [vmem:[%s415] sm:$0xff]
        %v419 = vld [vmem:[%s3] sm:$0xff]
        %v420 = vld [vmem:[%s3 + $0x8] sm:$0xff]
        %v421 = vld [vmem:[%s3 + $0x10] sm:$0xff]
        %v422 = vld [vmem:[%s3 + $0x18] sm:$0xff]
        %v423 = vld [vmem:[%s4] sm:$0x1]
        %v425 = vperm.slane %v423, 0
        %vm427 = vcmask 261120
        %v429 = vsel %vm427, %v416, 0
        %431 = vmatpush.msra.mxu0 0.0
        %432 = vmatpush.msra.mxu0 0.0
        %433 = vmatpush.msra.mxu0 0.0
        %434 = vmatpush.msra.mxu0 0.0
        %435 = vmatpush.msra.mxu0 0.0
        %436 = vmatpush.msra.mxu0 0.0
        %437 = vmatpush.msra.mxu0 0.0
        %438 = vmatpush.msra.mxu0 0.0
        %439 = vmatpush.msra.mxu0 0.0
        %440 = vmatpush.msra.mxu0 0.0
        %441 = vmatpush.msra.mxu0 0.0
        %442 = vmatpush.msra.mxu0 0.0
        %443 = vmatpush.msra.mxu0 %v422
        %444 = vmatpush.msra.mxu0 %v421
        %445 = vmatpush.msra.mxu0 %v420
        %446 = vmatpush.msra.mxu0 %v419
        %447 = vmatmul.f32.gmra.mxu0 %v429
        %v448 = vpop.f32.mrf.mxu0
        %v449 = vadd.f32 %v425, %v448
        %450 = vdwg.mxu0
        %v451 = vld [vmem:[%s5] sm:$0xff]
        %v452 = vld [vmem:[%s5 + $0x8] sm:$0xff]
        %v453 = vld [vmem:[%s5 + $0x10] sm:$0xff]
        %v454 = vld [vmem:[%s5 + $0x18] sm:$0xff]
        %v455 = vld [vmem:[%s6] sm:$0x1]
        %v457 = vperm.slane %v455, 0
        %v460 = vsel %vm427, %v417, 0
        %462 = vmatpush.msra.mxu0 0.0
        %463 = vmatpush.msra.mxu0 0.0
        %464 = vmatpush.msra.mxu0 0.0
        %465 = vmatpush.msra.mxu0 0.0
        %466 = vmatpush.msra.mxu0 0.0
        %467 = vmatpush.msra.mxu0 0.0
        %468 = vmatpush.msra.mxu0 0.0
        %469 = vmatpush.msra.mxu0 0.0
        %470 = vmatpush.msra.mxu0 0.0
        %471 = vmatpush.msra.mxu0 0.0
        %472 = vmatpush.msra.mxu0 0.0
        %473 = vmatpush.msra.mxu0 0.0
        %474 = vmatpush.msra.mxu0 %v454
        %475 = vmatpush.msra.mxu0 %v453
        %476 = vmatpush.msra.mxu0 %v452
        %477 = vmatpush.msra.mxu0 %v451
        %478 = vmatmul.f32.gmra.mxu0 %v460
        %v479 = vpop.f32.mrf.mxu0
        %v480 = vadd.f32 %v457, %v479
        %481 = vdwg.mxu0
        %v482 = vld [vmem:[%s7] sm:$0xff]
        %v483 = vld [vmem:[%s7 + $0x8] sm:$0xff]
        %v484 = vld [vmem:[%s7 + $0x10] sm:$0xff]
        %v485 = vld [vmem:[%s7 + $0x18] sm:$0xff]
        %v486 = vld [vmem:[%s8] sm:$0x1]
        %v488 = vperm.slane %v486, 0
        %v491 = vsel %vm427, %v418, 0
        %493 = vmatpush.msra.mxu0 0.0
        %494 = vmatpush.msra.mxu0 0.0
        %495 = vmatpush.msra.mxu0 0.0
        %496 = vmatpush.msra.mxu0 0.0
        %497 = vmatpush.msra.mxu0 0.0
        %498 = vmatpush.msra.mxu0 0.0
        %499 = vmatpush.msra.mxu0 0.0
        %500 = vmatpush.msra.mxu0 0.0
        %501 = vmatpush.msra.mxu0 0.0
        %502 = vmatpush.msra.mxu0 0.0
        %503 = vmatpush.msra.mxu0 0.0
        %504 = vmatpush.msra.mxu0 0.0
        %505 = vmatpush.msra.mxu0 %v485
        %506 = vmatpush.msra.mxu0 %v484
        %507 = vmatpush.msra.mxu0 %v483
        %508 = vmatpush.msra.mxu0 %v482
        %509 = vmatmul.f32.gmra.mxu0 %v491
        %v510 = vpop.f32.mrf.mxu0
        %v511 = vadd.f32 %v488, %v510
        %512 = vdwg.mxu0
        %v513 = vlaneseq
        %v514 = vshrl.u32 %v513, 7
        %v515 = vlaneseq
        %v516 = vand.u32 %v515, 127
        %vm517 = vcmp.gt.s32.totalorder %v516, %v514
        %v518 = vsel %vm517, -inf, 0.0
        %vm519 = vcmask 64512
        %v521 = vsel %vm519, %v449, 0
        %v524 = vsel %vm519, %v480, 0
        %526 = vmatpush.xpose.msra.mxu0 0.0
        %527 = vmatpush.xpose.msra.mxu0 0.0
        %528 = vmatpush.xpose.msra.mxu0 0.0
        %529 = vmatpush.xpose.msra.mxu0 0.0
        %530 = vmatpush.xpose.msra.mxu0 0.0
        %531 = vmatpush.xpose.msra.mxu0 0.0
        %532 = vmatpush.xpose.msra.mxu0 0.0
        %533 = vmatpush.xpose.msra.mxu0 0.0
        %534 = vmatpush.xpose.msra.mxu0 0.0
        %535 = vmatpush.xpose.msra.mxu0 0.0
        %536 = vmatpush.xpose.msra.mxu0 0.0
        %537 = vmatpush.xpose.msra.mxu0 0.0
        %538 = vmatpush.xpose.msra.mxu0 0.0
        %539 = vmatpush.xpose.msra.mxu0 0.0
        %540 = vmatpush.xpose.msra.mxu0 0.0
        %541 = vmatpush.xpose.msra.mxu0 %v524
        %542 = vmatmul.f32.gmra.mxu0 %v521
        %v543 = vpop.f32.mrf.mxu0
        %v544 = vadd.f32 %v518, %v543
        %545 = vdwg.mxu0
        %v546 = vsel %vm519, %v544, -inf
        %547 = vmax.xlane.f32.xlu0 %v546
        %v548 = vpop.xlane.xlu0 %547
        %v549 = vsub.f32 %v544, %v548
        %v550 = vmul.f32 %v549, 1.442695
        %v551 = vpow.pop %v550
        %v552 = vsel %vm519, %v551, 0.0
        %553 = vadd.xlane.f32.xlu0 %v552
        %v554 = vpop.xlane.xlu0 %553
        %v555 = vrcp.pop %v554
        %v556 = vmul.f32 %v551, %v555
        %v558 = vsel %vm519, %v556, 0
        %560 = vmatpush.msra.mxu0 0.0
        %561 = vmatpush.msra.mxu0 0.0
        %562 = vmatpush.msra.mxu0 0.0
        %563 = vmatpush.msra.mxu0 0.0
        %564 = vmatpush.msra.mxu0 0.0
        %565 = vmatpush.msra.mxu0 0.0
        %566 = vmatpush.msra.mxu0 0.0
        %567 = vmatpush.msra.mxu0 0.0
        %568 = vmatpush.msra.mxu0 0.0
        %569 = vmatpush.msra.mxu0 0.0
        %570 = vmatpush.msra.mxu0 0.0
        %571 = vmatpush.msra.mxu0 0.0
        %572 = vmatpush.msra.mxu0 0.0
        %573 = vmatpush.msra.mxu0 0.0
        %574 = vmatpush.msra.mxu0 0.0
        %575 = vmatpush.msra.mxu0 %v511
        %576 = vmatmul.f32.gmra.mxu0 %v558
        %v577 = vpop.f32.mrf.mxu0
        %v578 = vadd.f32 0.0, %v577
        %579 = vdwg.mxu0
        %580 = vrot.lane.b32.xlu0 %v449, 120
        %v581 = vpop.permute.xlu0 %580
        %582 = vrot.lane.b32.xlu0 %v480, 120
        %v583 = vpop.permute.xlu0 %582
        %v584 = vsel %vm519, %v581, 0
        %v586 = vsel %vm519, %v583, 0
        %588 = vmatpush.xpose.msra.mxu0 0.0
        %589 = vmatpush.xpose.msra.mxu0 0.0
        %590 = vmatpush.xpose.msra.mxu0 0.0
        %591 = vmatpush.xpose.msra.mxu0 0.0
        %592 = vmatpush.xpose.msra.mxu0 0.0
        %593 = vmatpush.xpose.msra.mxu0 0.0
        %594 = vmatpush.xpose.msra.mxu0 0.0
        %595 = vmatpush.xpose.msra.mxu0 0.0
        %596 = vmatpush.xpose.msra.mxu0 0.0
        %597 = vmatpush.xpose.msra.mxu0 0.0
        %598 = vmatpush.xpose.msra.mxu0 0.0
        %599 = vmatpush.xpose.msra.mxu0 0.0
        %600 = vmatpush.xpose.msra.mxu0 0.0
        %601 = vmatpush.xpose.msra.mxu0 0.0
        %602 = vmatpush.xpose.msra.mxu0 0.0
        %603 = vmatpush.xpose.msra.mxu0 %v586
        %604 = vmatmul.f32.gmra.mxu0 %v584
        %v605 = vpop.f32.mrf.mxu0
        %v606 = vadd.f32 %v518, %v605
        %607 = vdwg.mxu0
        %v608 = vsel %vm519, %v606, -inf
        %609 = vmax.xlane.f32.xlu0 %v608
        %v610 = vpop.xlane.xlu0 %609
        %v611 = vsub.f32 %v606, %v610
        %v612 = vmul.f32 %v611, 1.442695
        %v613 = vpow.pop %v612
        %v614 = vsel %vm519, %v613, 0.0
        %615 = vadd.xlane.f32.xlu0 %v614
        %v616 = vpop.xlane.xlu0 %615
        %v617 = vrcp.pop %v616
        %v618 = vmul.f32 %v613, %v617
        %v620 = vsel %vm519, %v618, 0
        %622 = vmatpush.msra.mxu0 0.0
        %623 = vmatpush.msra.mxu0 0.0
        %624 = vmatpush.msra.mxu0 0.0
        %625 = vmatpush.msra.mxu0 0.0
        %626 = vmatpush.msra.mxu0 0.0
        %627 = vmatpush.msra.mxu0 0.0
        %628 = vmatpush.msra.mxu0 0.0
        %629 = vmatpush.msra.mxu0 0.0
        %630 = vmatpush.msra.mxu0 0.0
        %631 = vmatpush.msra.mxu0 0.0
        %632 = vmatpush.msra.mxu0 0.0
        %633 = vmatpush.msra.mxu0 0.0
        %634 = vmatpush.msra.mxu0 0.0
        %635 = vmatpush.msra.mxu0 0.0
        %636 = vmatpush.msra.mxu0 0.0
        %637 = vmatpush.msra.mxu0 %v511
        %638 = vmatmul.f32.gmra.mxu0 %v620
        %v639 = vpop.f32.mrf.mxu0
        %v640 = vadd.f32 0.0, %v639
        %641 = vdwg.mxu0
        %642 = vrot.lane.b32.xlu0 %v449, 112
        %v643 = vpop.permute.xlu0 %642
        %644 = vrot.lane.b32.xlu0 %v480, 112
        %v645 = vpop.permute.xlu0 %644
        %v646 = vsel %vm519, %v643, 0
        %v648 = vsel %vm519, %v645, 0
        %650 = vmatpush.xpose.msra.mxu0 0.0
        %651 = vmatpush.xpose.msra.mxu0 0.0
        %652 = vmatpush.xpose.msra.mxu0 0.0
        %653 = vmatpush.xpose.msra.mxu0 0.0
        %654 = vmatpush.xpose.msra.mxu0 0.0
        %655 = vmatpush.xpose.msra.mxu0 0.0
        %656 = vmatpush.xpose.msra.mxu0 0.0
        %657 = vmatpush.xpose.msra.mxu0 0.0
        %658 = vmatpush.xpose.msra.mxu0 0.0
        %659 = vmatpush.xpose.msra.mxu0 0.0
        %660 = vmatpush.xpose.msra.mxu0 0.0
        %661 = vmatpush.xpose.msra.mxu0 0.0
        %662 = vmatpush.xpose.msra.mxu0 0.0
        %663 = vmatpush.xpose.msra.mxu0 0.0
        %664 = vmatpush.xpose.msra.mxu0 0.0
        %665 = vmatpush.xpose.msra.mxu0 %v648
        %666 = vmatmul.f32.gmra.mxu0 %v646
        %v667 = vpop.f32.mrf.mxu0
        %v668 = vadd.f32 %v518, %v667
        %669 = vdwg.mxu0
        %v670 = vsel %vm519, %v668, -inf
        %671 = vmax.xlane.f32.xlu0 %v670
        %v672 = vpop.xlane.xlu0 %671
        %v673 = vsub.f32 %v668, %v672
        %v674 = vmul.f32 %v673, 1.442695
        %v675 = vpow.pop %v674
        %v676 = vsel %vm519, %v675, 0.0
        %677 = vadd.xlane.f32.xlu0 %v676
        %v678 = vpop.xlane.xlu0 %677
        %v679 = vrcp.pop %v678
        %v680 = vmul.f32 %v675, %v679
        %v682 = vsel %vm519, %v680, 0
        %684 = vmatpush.msra.mxu0 0.0
        %685 = vmatpush.msra.mxu0 0.0
        %686 = vmatpush.msra.mxu0 0.0
        %687 = vmatpush.msra.mxu0 0.0
        %688 = vmatpush.msra.mxu0 0.0
        %689 = vmatpush.msra.mxu0 0.0
        %690 = vmatpush.msra.mxu0 0.0
        %691 = vmatpush.msra.mxu0 0.0
        %692 = vmatpush.msra.mxu0 0.0
        %693 = vmatpush.msra.mxu0 0.0
        %694 = vmatpush.msra.mxu0 0.0
        %695 = vmatpush.msra.mxu0 0.0
        %696 = vmatpush.msra.mxu0 0.0
        %697 = vmatpush.msra.mxu0 0.0
        %698 = vmatpush.msra.mxu0 0.0
        %699 = vmatpush.msra.mxu0 %v511
        %700 = vmatmul.f32.gmra.mxu0 %v682
        %v701 = vpop.f32.mrf.mxu0
        %v702 = vadd.f32 0.0, %v701
        %703 = vdwg.mxu0
        %704 = vrot.lane.b32.xlu0 %v449, 104
        %v705 = vpop.permute.xlu0 %704
        %706 = vrot.lane.b32.xlu0 %v480, 104
        %v707 = vpop.permute.xlu0 %706
        %v708 = vsel %vm519, %v705, 0
        %v710 = vsel %vm519, %v707, 0
        %712 = vmatpush.xpose.msra.mxu0 0.0
        %713 = vmatpush.xpose.msra.mxu0 0.0
        %714 = vmatpush.xpose.msra.mxu0 0.0
        %715 = vmatpush.xpose.msra.mxu0 0.0
        %716 = vmatpush.xpose.msra.mxu0 0.0
        %717 = vmatpush.xpose.msra.mxu0 0.0
        %718 = vmatpush.xpose.msra.mxu0 0.0
        %719 = vmatpush.xpose.msra.mxu0 0.0
        %720 = vmatpush.xpose.msra.mxu0 0.0
        %721 = vmatpush.xpose.msra.mxu0 0.0
        %722 = vmatpush.xpose.msra.mxu0 0.0
        %723 = vmatpush.xpose.msra.mxu0 0.0
        %724 = vmatpush.xpose.msra.mxu0 0.0
        %725 = vmatpush.xpose.msra.mxu0 0.0
        %726 = vmatpush.xpose.msra.mxu0 0.0
        %727 = vmatpush.xpose.msra.mxu0 %v710
        %728 = vmatmul.f32.gmra.mxu0 %v708
        %v729 = vpop.f32.mrf.mxu0
        %v730 = vadd.f32 %v518, %v729
        %731 = vdwg.mxu0
        %v732 = vsel %vm519, %v730, -inf
        %733 = vmax.xlane.f32.xlu0 %v732
        %v734 = vpop.xlane.xlu0 %733
        %v735 = vsub.f32 %v730, %v734
        %v736 = vmul.f32 %v735, 1.442695
        %v737 = vpow.pop %v736
        %v738 = vsel %vm519, %v737, 0.0
        %739 = vadd.xlane.f32.xlu0 %v738
        %v740 = vpop.xlane.xlu0 %739
        %v741 = vrcp.pop %v740
        %v742 = vmul.f32 %v737, %v741
        %v744 = vsel %vm519, %v742, 0
        %746 = vmatpush.msra.mxu0 0.0
        %747 = vmatpush.msra.mxu0 0.0
        %748 = vmatpush.msra.mxu0 0.0
        %749 = vmatpush.msra.mxu0 0.0
        %750 = vmatpush.msra.mxu0 0.0
        %751 = vmatpush.msra.mxu0 0.0
        %752 = vmatpush.msra.mxu0 0.0
        %753 = vmatpush.msra.mxu0 0.0
        %754 = vmatpush.msra.mxu0 0.0
        %755 = vmatpush.msra.mxu0 0.0
        %756 = vmatpush.msra.mxu0 0.0
        %757 = vmatpush.msra.mxu0 0.0
        %758 = vmatpush.msra.mxu0 0.0
        %759 = vmatpush.msra.mxu0 0.0
        %760 = vmatpush.msra.mxu0 0.0
        %761 = vmatpush.msra.mxu0 %v511
        %762 = vmatmul.f32.gmra.mxu0 %v744
        %v763 = vpop.f32.mrf.mxu0
        %v764 = vadd.f32 0.0, %v763
        %765 = vdwg.mxu0
        %767 = vrot.lane.b32.xlu0 %v640, 32
        %v768 = vpop.permute.xlu0 %767
        %771 = vrot.lane.b32.xlu0 %v702, 64
        %v772 = vpop.permute.xlu0 %771
        %775 = vrot.lane.b32.xlu0 %v764, 96
        %v776 = vpop.permute.xlu0 %775
        %v778 = vsel %vm427, %v578, %v768
        %vm779 = vcmask 523264
        %v780 = vsel %vm779, %v778, %v772
        %vm781 = vcmask 785408
        %v782 = vsel %vm781, %v780, %v776
        %v783 = vld [vmem:[%s9] sm:$0xff]
        %v784 = vld [vmem:[%s9 + $0x8] sm:$0xff]
        %v785 = vld [vmem:[%s9 + $0x10] sm:$0xff]
        %v786 = vld [vmem:[%s9 + $0x18] sm:$0xff]
        %v787 = vld [vmem:[%s9 + $0x20] sm:$0xff]
        %v788 = vld [vmem:[%s9 + $0x28] sm:$0xff]
        %v789 = vld [vmem:[%s9 + $0x30] sm:$0xff]
        %v790 = vld [vmem:[%s9 + $0x38] sm:$0xff]
        %v791 = vld [vmem:[%s9 + $0x40] sm:$0xff]
        %v792 = vld [vmem:[%s9 + $0x48] sm:$0xff]
        %v793 = vld [vmem:[%s9 + $0x50] sm:$0xff]
        %v794 = vld [vmem:[%s9 + $0x58] sm:$0xff]
        %v795 = vld [vmem:[%s9 + $0x60] sm:$0xff]
        %v796 = vld [vmem:[%s9 + $0x68] sm:$0xff]
        %v797 = vld [vmem:[%s9 + $0x70] sm:$0xff]
        %v798 = vld [vmem:[%s9 + $0x78] sm:$0xff]
        %v799 = vld [vmem:[%s10] sm:$0x1]
        %v801 = vperm.slane %v799, 0
        %803 = vmatpush.msra.mxu0 %v798
        %804 = vmatpush.msra.mxu0 %v797
        %805 = vmatpush.msra.mxu0 %v796
        %806 = vmatpush.msra.mxu0 %v795
        %807 = vmatpush.msra.mxu0 %v794
        %808 = vmatpush.msra.mxu0 %v793
        %809 = vmatpush.msra.mxu0 %v792
        %810 = vmatpush.msra.mxu0 %v791
        %811 = vmatpush.msra.mxu0 %v790
        %812 = vmatpush.msra.mxu0 %v789
        %813 = vmatpush.msra.mxu0 %v788
        %814 = vmatpush.msra.mxu0 %v787
        %815 = vmatpush.msra.mxu0 %v786
        %816 = vmatpush.msra.mxu0 %v785
        %817 = vmatpush.msra.mxu0 %v784
        %818 = vmatpush.msra.mxu0 %v783
        %819 = vmatmul.f32.gmra.mxu0 %v782
        %v820 = vpop.f32.mrf.mxu0
        %v821 = vadd.f32 %v801, %v820
        %822 = vdwg.mxu0
        %823 = vst.msk [vmem:[%s403] sm:$0xff] %vm427, %v821
        %s824 = sand.u32 %s279, 1
        %s825 = scalar_lea.sflag [#allocation3], %s824
        %s826 = sand.u32 %s279, 1
        %s827 = smul.addr %s826, 8
        %s828 = scalar_lea.vmem [#allocation2], %s827
        // Predicated region
        $region65: #{tpu_custom_call.1} parent=63 // pred_check
          %p829 = pneg %p289
        $region66: #{tpu_custom_call.1} parent=63 // pred_check_branch
          %831 = sbr.rel (%p829) target = $region68
        $region67: #{tpu_custom_call.1} parent=63 // pred_region
          %833 = vsyncadd %s825, 0
          %s834 = smul.addr %s25, 8
          %s835 = scalar_lea.hbm %s11, %s834
          %s837 = sshll.u32 %s828, 4
          %s838 = int_to_ptr.vmem [resolvable:$true] %s837
          %s839 = sshll.u32 %s835, 4
          %s840 = int_to_ptr.hbm [resolvable:$true] %s839
          %842 = dma.vmem_to_hbm [thread:$0]  %s838, 128, %s840, %s825
        $region68: #{tpu_custom_call.1} parent=63 // pred_fallthru
          _
      $region64: #{tpu_custom_call.1} parent=5 // pred_fallthru
        _
      %p843 = scmp.le.s32.totalorder 2, %s20
      // Predicated region
      $region69: #{tpu_custom_call.1} parent=5 // pred_check
        %p844 = pneg %p843
      $region70: #{tpu_custom_call.1} parent=5 // pred_check_branch
        %846 = sbr.rel (%p844) target = $region72
      $region71: #{tpu_custom_call.1} parent=5 // pred_region
        %s847 = ssub.s32 %s20, 2
        // Predicated region
        $region73: #{tpu_custom_call.1} parent=71 // pred_check
          %p848 = pneg %p295
        $region74: #{tpu_custom_call.1} parent=71 // pred_check_branch
          %850 = sbr.rel (%p848) target = $region76
        $region75: #{tpu_custom_call.1} parent=71 // pred_region
          %s851 = sand.u32 %s280, 1
          %s852 = scalar_lea.sflag [#allocation3], %s851
          %s853 = sand.u32 %s280, 1
          %s854 = smul.addr %s853, 8
          %s855 = scalar_lea.vmem [#allocation2], %s854
          %857 = dma.done %s852, 128
        $region76: #{tpu_custom_call.1} parent=71 // pred_fallthru
          _
      $region72: #{tpu_custom_call.1} parent=5 // pred_fallthru
        _
    $region6: #{tpu_custom_call.1} parent=1 // loop_footer
      %s24 = sadd.s32 1, %s20
    $region7: #{tpu_custom_call.1} parent=1 // loop_footer_branch
      %19 = sbr.rel target = $region3
    $region8: #{tpu_custom_call.1} parent=1 // loop_exit
      _
    %858 = vsyncpa [#allocation3], 1
    %s859 = scalar_lea.sflag [#allocation3], 1
    %860 = vsyncpa %s859, 1

</llo_original>
